<compile_context>
chip_gen: v7x
topology: tpu7x:2x2x1
jax: 0.10.0
libtpu: 0.0.40
codegen_flags: <defaults>
</compile_context>

<pallas_src>
import functools
import math

import jax
import jax.numpy as jnp
from jax.experimental import pallas as pl
from jax.experimental.pallas import tpu as pltpu


def _round_up(x, m):
    return ((x + m - 1) // m) * m


def _vmem_capacity_bytes():
    try:
        return int(pltpu.get_tpu_info().vmem_capacity_bytes)
    except Exception:
        return 64 * 2 ** 20          # conservative floor (v7x per-TensorCore VMEM)


def _default_block_q(Lq, dtype, vmem_cap):
    # 256+ fills the 256-tall v6e/v7x MXU; keep the ceiling lower on 64-MiB parts.
    ceiling = 512 if vmem_cap >= (96 << 20) else 256
    bq = min(ceiling, _round_up(Lq, 8))
    if jnp.dtype(dtype).itemsize < 4:
        bq = _round_up(bq, 16)       # bf16 packs 16 rows per sublane
    return max(bq, 8)


def _supports_single_buffered_blockspecs():
    """Feature-probe: does this jax build lower pipeline_mode=pl.Buffered(1)?"""
    if not hasattr(pl, "Buffered"):
        return False

    def _k(a_ref, o_ref):
        o_ref[...] = a_ref[...] + 1.0

    try:
        spec = pl.BlockSpec((8, 128), lambda i: (0, 0), pipeline_mode=pl.Buffered(1))
        fn = pl.pallas_call(
            _k,
            out_shape=jax.ShapeDtypeStruct((8, 128), jnp.float32),
            grid=(2,),
            in_specs=[spec],
            out_specs=pl.BlockSpec((8, 128), lambda i: (0, 0)),
        )
        jax.block_until_ready(fn(jnp.zeros((8, 128), jnp.float32)))
        return True
    except Exception:
        return False


# Packed-vector row layout (shared by kernel / reference / init_params):
#   0: bq   1: bk   2: bv   3: bo   4: gamma   5: beta   6: bfc


def _attention_fusion_kernel(
    x_ref, z_ref, wq_ref, wkv_ref, wo_ref, wfc_ref, vecs_ref,
    out_ref, kv_ref, oh_ref,
    *, num_heads, head_dim, scale, eps,
):
    f32 = jnp.float32
    E = wq_ref.shape[0]
    cdt = wq_ref.dtype                      # MXU operand / storage dtype
    hd = head_dim

    x = x_ref[0]                            # (block_q, E)

    vecs = vecs_ref[...].astype(f32)        # (7, E)
    b_q = vecs[0:1]
    b_k = vecs[1:2]
    b_v = vecs[2:3]
    b_o = vecs[3:4]
    gamma = vecs[4:5]
    beta = vecs[5:6]
    b_fc = vecs[6:7]

    # ---- K/V projection: computed once per batch (first query tile), cached ----
    @pl.when(pl.program_id(1) == 0)
    def _():
        z = z_ref[0]                                                  # (Lk, E)
        kv = jnp.dot(z, wkv_ref[...], preferred_element_type=f32)    # (Lk, 2E)
        kv_ref[:, :E] = (kv[:, :E] + b_k).astype(cdt)
        kv_ref[:, E:] = (kv[:, E:] + b_v).astype(cdt)

    # ---- Q projection; softmax scale folded in once ----
    q = (jnp.dot(x, wq_ref[...], preferred_element_type=f32) + b_q) * scale

    # ---- per-head attention into a contiguous head-output buffer ----
    for h in range(num_heads):              # static unroll; num_heads is small
        sl = slice(h * hd, (h + 1) * hd)
        q_h = q[:, sl].astype(cdt)                                    # (bq, hd)
        k_h = kv_ref[:, sl]                                           # (Lk, hd)
        v_h = kv_ref[:, E + h * hd:E + (h + 1) * hd]                  # (Lk, hd)
        s = jnp.einsum("qd,kd->qk", q_h, k_h,
                       preferred_element_type=f32)                    # (bq, Lk)
        s = s - jnp.max(s, axis=-1, keepdims=True)
        p = jnp.exp(s)
        denom = jnp.sum(p, axis=-1, keepdims=True)                    # (bq, 1)
        o_h = jnp.dot(p.astype(cdt), v_h, preferred_element_type=f32)
        o_h = o_h * pl.reciprocal(denom, approx=True)                 # EUP, not VALU div
        oh_ref[:, sl] = o_h.astype(cdt)

    # ---- single full-width output projection ----
    attn_out = jnp.dot(oh_ref[...], wo_ref[...], preferred_element_type=f32) + b_o

    # ---- residual + LayerNorm (f32) ----
    fused = attn_out + x.astype(f32)
    mean = jnp.mean(fused, axis=-1, keepdims=True)
    cent = fused - mean
    var = jnp.mean(cent * cent, axis=-1, keepdims=True)
    normed = cent * jax.lax.rsqrt(var + eps) * gamma + beta

    # ---- fc + ReLU ----
    y = jnp.dot(normed.astype(cdt), wfc_ref[...],
                preferred_element_type=f32) + b_fc
    out_ref[0] = jnp.maximum(y, 0.0).astype(out_ref.dtype)


@functools.partial(jax.jit,
                   static_argnames=("num_heads", "block_q", "eps", "weight_buffers"))
def attention_fusion_forward(rep_x, rep_z, params, *, num_heads, block_q=None,
                             eps=1e-5, weight_buffers=2):
    """Fused MHA + residual + LayerNorm + Linear + ReLU. Returns (B, Lq, E).

    weight_buffers=1 single-buffers the grid-invariant weight specs (needs
    pl.Buffered(1) support; probe with _supports_single_buffered_blockspecs()).
    """
    x = rep_x
    if x.ndim == 4:                                   # (B, h, w, C) -> (B, h*w, C)
        b_, hh, ww, cc = x.shape
        x = x.reshape(b_, hh * ww, cc)
    z = rep_z
    if z.ndim == 4:
        b_, hh, ww, cc = z.shape
        z = z.reshape(b_, hh * ww, cc)

    B, Lq, E = x.shape
    _, Lk, _ = z.shape
    assert E % num_heads == 0, "embed_dim must be divisible by num_heads"
    head_dim = E // num_heads
    scale = 1.0 / math.sqrt(head_dim)

    cdt = params["wq"].dtype
    if x.dtype != cdt:
        x = x.astype(cdt)
    if z.dtype != cdt:
        z = z.astype(cdt)

    vmem_cap = _vmem_capacity_bytes()
    if block_q is None:
        block_q = _default_block_q(Lq, cdt, vmem_cap)
    assert block_q % 8 == 0, "block_q must be a multiple of 8"
    n_q = pl.cdiv(Lq, block_q)    # ragged tail handled by Pallas edge masking

    # ---- VMEM budget: streamed blocks + weights + scratch + f32 temporaries ----
    def nbytes(shape, dt):
        return math.prod(shape) * jnp.dtype(dt).itemsize

    weight_bytes = (3 * nbytes((E, E), cdt) + nbytes((E, 2 * E), cdt)
                    + nbytes((8, E), cdt))
    stream_bytes = 2 * (2 * nbytes((block_q, E), cdt) + nbytes((Lk, E), cdt))
    scratch_bytes = nbytes((Lk, 2 * E), cdt) + nbytes((block_q, E), cdt)
    live_f32 = 4 * (6 * block_q * E + 3 * block_q * max(Lk, 128) + 2 * Lk * E)
    budget = (weight_buffers * weight_bytes + stream_bytes + scratch_bytes
              + live_f32 + (8 << 20))
    vmem_limit = min(int(0.85 * vmem_cap), max(budget, 32 << 20))

    const_kwargs = {}
    if weight_buffers == 1 and hasattr(pl, "Buffered"):
        # Grid-invariant operands: one VMEM buffer is enough (halves weight VMEM).
        const_kwargs["pipeline_mode"] = pl.Buffered(1)

    def const_spec(shape):
        return pl.BlockSpec(shape, lambda b, qi: (0, 0), **const_kwargs)

    in_specs = [
        pl.BlockSpec((1, block_q, E), lambda b, qi: (b, qi, 0)),   # x (query tile)
        pl.BlockSpec((1, Lk, E), lambda b, qi: (b, 0, 0)),         # z (per batch)
        const_spec((E, E)),        # wq
        const_spec((E, 2 * E)),    # wkv (packed K|V)
        const_spec((E, E)),        # wo
        const_spec((E, E)),        # wfc
        const_spec((7, E)),        # packed bias/affine vectors
    ]
    out_specs = pl.BlockSpec((1, block_q, E), lambda b, qi: (b, qi, 0))

    kernel = functools.partial(
        _attention_fusion_kernel,
        num_heads=num_heads, head_dim=head_dim, scale=scale, eps=eps)

    out = pl.pallas_call(
        kernel,
        out_shape=jax.ShapeDtypeStruct((B, Lq, E), cdt),
        grid_spec=pltpu.PrefetchScalarGridSpec(
            num_scalar_prefetch=0,
            grid=(B, n_q),
            in_specs=in_specs,
            out_specs=out_specs,
            scratch_shapes=[pltpu.VMEM((Lk, 2 * E), cdt),      # cached K|V projection
                            pltpu.VMEM((block_q, E), cdt)],    # contiguous head outputs
        ),
        compiler_params=pltpu.CompilerParams(
            # qi axis carries the cached-KV scratch -> "arbitrary"; batch stays parallel.
            dimension_semantics=("parallel", "arbitrary"),
            vmem_limit_bytes=vmem_limit,
        ),
    )(x, z, params["wq"], params["wkv"], params["wo"], params["wfc"], params["vecs"])
    return out


def init_params(key, embed_dim):
    """Deterministic synthetic parameters; weights stored (in, out)."""
    E = embed_dim
    keys = jax.random.split(key, 12)

    def unif(k, shape, bound):
        return jax.random.uniform(k, shape, minval=-bound, maxval=bound,
                                  dtype=jnp.float32)

    b = 1.0 / math.sqrt(E)
    bq = unif(keys[1], (1, E), b)
    bk = unif(keys[3], (1, E), b)
    bv = unif(keys[4], (1, E), b)
    bo = unif(keys[6], (1, E), b)
    gamma = 1.0 + 0.05 * unif(keys[7], (1, E), 1.0)
    beta = 0.05 * unif(keys[8], (1, E), 1.0)
    bfc = unif(keys[10], (1, E), b)
    return {
        "wq": unif(keys[0], (E, E), b),
        "wkv": unif(keys[2], (E, 2 * E), b),
        "wo": unif(keys[5], (E, E), b),
        "wfc": unif(keys[9], (E, E), b),
        # rows: bq, bk, bv, bo, gamma, beta, bfc
        "vecs": jnp.concatenate([bq, bk, bv, bo, gamma, beta, bfc], axis=0),
    }


def reference_forward(rep_x, rep_z, params, *, num_heads, eps=1e-5):
    """Pure-JAX reference of the PyTorch forward (f32)."""
    x = rep_x
    if x.ndim == 4:
        x = x.reshape(x.shape[0], -1, x.shape[-1])
    z = rep_z
    if z.ndim == 4:
        z = z.reshape(z.shape[0], -1, z.shape[-1])
    B, Lq, E = x.shape
    hd = E // num_heads
    scale = 1.0 / math.sqrt(hd)

    vecs = params["vecs"]
    b_q, b_k, b_v, b_o, gamma, beta, b_fc = (vecs[i] for i in range(7))

    q = x @ params["wq"] + b_q
    k = z @ params["wkv"][:, :E] + b_k
    v = z @ params["wkv"][:, E:] + b_v

    def heads(t):  # (B, L, E) -> (B, H, L, hd)
        b_, l_, _ = t.shape
        return t.reshape(b_, l_, num_heads, hd).transpose(0, 2, 1, 3)

    qh, kh, vh = heads(q), heads(k), heads(v)
    s = jnp.einsum("bhqd,bhkd->bhqk", qh, kh) * scale
    p = jax.nn.softmax(s, axis=-1)
    o = jnp.einsum("bhqk,bhkd->bhqd", p, vh)
    o = o.transpose(0, 2, 1, 3).reshape(B, Lq, E)
    attn_out = o @ params["wo"] + b_o

    fused = attn_out + x
    mean = fused.mean(-1, keepdims=True)
    var = ((fused - mean) ** 2).mean(-1, keepdims=True)
    normed = (fused - mean) / jnp.sqrt(var + eps) * gamma + beta
    return jnp.maximum(normed @ params["wfc"] + b_fc, 0.0)


if __name__ == "__main__":
    # rep_x is a 4-D feature map, rep_z a 3-D token sequence; E=128 is lane-dense.
    batch, h, w, embed_dim, num_heads, Lk = 2, 8, 8, 128, 4, 16

    key = jax.random.PRNGKey(0)
    kx, kz, kp = jax.random.split(key, 3)
    rep_x = jax.random.normal(kx, (batch, h, w, embed_dim), dtype=jnp.float32)
    rep_z = jax.random.normal(kz, (batch, Lk, embed_dim), dtype=jnp.float32)
    params = init_params(kp, embed_dim)

    ref = reference_forward(rep_x, rep_z, params, num_heads=num_heads)

    # Single-buffer the grid-invariant weight specs if this jax build supports it.
    wbuf = 1 if _supports_single_buffered_blockspecs() else 2

    # 1) f32, auto block_q (= full Lq=64 per tile -> grid (B, 1)).
    out = attention_fusion_forward(rep_x, rep_z, params, num_heads=num_heads,
                                   weight_buffers=wbuf)
    jax.block_until_ready(out)
    assert out.shape == ref.shape
    err = float(jnp.max(jnp.abs(out - ref)))
    assert jnp.allclose(out, ref, atol=5e-3, rtol=5e-3), f"f32 mismatch: {err}"

    # 2) f32, block_q=48 -> ragged tail (no wrapper pad) + cached-KV reuse across qi.
    out48 = attention_fusion_forward(rep_x, rep_z, params, num_heads=num_heads,
                                     block_q=48, weight_buffers=wbuf)
    jax.block_until_ready(out48)
    err48 = float(jnp.max(jnp.abs(out48 - ref)))
    assert jnp.allclose(out48, ref, atol=5e-3, rtol=5e-3), \
        f"ragged-tile mismatch: {err48}"

    # 3) bf16 MXU-operand path (softmax/LayerNorm math stays f32 inside the kernel).
    params_bf16 = jax.tree_util.tree_map(lambda p: p.astype(jnp.bfloat16), params)
    out_bf16 = attention_fusion_forward(rep_x.astype(jnp.bfloat16),
                                        rep_z.astype(jnp.bfloat16),
                                        params_bf16, num_heads=num_heads,
                                        block_q=32, weight_buffers=wbuf)
    jax.block_until_ready(out_bf16)
    err_bf16 = float(jnp.max(jnp.abs(out_bf16.astype(jnp.float32) - ref)))
    assert jnp.allclose(out_bf16.astype(jnp.float32), ref, atol=0.2, rtol=0.2), \
        f"bf16 mismatch: {err_bf16}"

    print("KERNEL_OK")
</pallas_src>

<mosaic_0001>
module attributes {stable_mosaic.version = 11 : i64} {
  func.func @_k(%arg0: i32, %arg1: memref<8x128xf32, #tpu.memory_space<vmem>>, %arg2: memref<8x128xf32, #tpu.memory_space<vmem>>) attributes {dimension_semantics = [#tpu.dimension_semantics<arbitrary>], iteration_bounds = array<i64: 2>, scalar_prefetch = 0 : i64, scratch_operands = 0 : i64, tpu.core_type = #tpu.core_type<tc>, window_params = [{pipeline_mode = #tpu.pipeline_mode<synchronous>, transform_indices = @transform_0, window_bounds = array<i64: 8, 128>}, {pipeline_mode = #tpu.pipeline_mode<synchronous>, transform_indices = @transform_1, window_bounds = array<i64: 8, 128>}]} {
    %c0 = arith.constant 0 : index
    %c0_0 = arith.constant 0 : index
    %0 = vector.load %arg1[%c0, %c0_0] : memref<8x128xf32, #tpu.memory_space<vmem>>, vector<8x128xf32>
    %cst = arith.constant 1.000000e+00 : f32
    %1 = vector.broadcast %cst : f32 to vector<8x128xf32>
    %2 = arith.addf %0, %1 : vector<8x128xf32>
    %c0_1 = arith.constant 0 : index
    %c0_2 = arith.constant 0 : index
    %3 = vector.load %arg2[%c0_1, %c0_2] : memref<8x128xf32, #tpu.memory_space<vmem>>, vector<8x128xf32>
    tpu.vector_store %arg2[%c0_1, %c0_2], %2 {strides = array<i32>} : memref<8x128xf32, #tpu.memory_space<vmem>>, vector<8x128xf32>,
    return
  }
  func.func @transform_0(%arg0: i32) -> (i32, i32) {
    %c0_i32 = arith.constant 0 : i32
    %c0_i32_0 = arith.constant 0 : i32
    %c0_i32_1 = arith.constant 0 : i32
    return %c0_i32, %c0_i32_0 : i32, i32
  }
  func.func @transform_1(%arg0: i32) -> (i32, i32) {
    %c0_i32 = arith.constant 0 : i32
    %c0_i32_0 = arith.constant 0 : i32
    %c0_i32_1 = arith.constant 0 : i32
    return %c0_i32, %c0_i32_0 : i32, i32
  }
}

module attributes {stable_mosaic.version = 11 : i64} {
  func.func @_attention_fusion_kernel(%arg0: i32, %arg1: i32, %arg2: memref<1x64x128xf32, #tpu.memory_space<vmem>>, %arg3: memref<1x16x128xf32, #tpu.memory_space<vmem>>, %arg4: memref<128x128xf32, #tpu.memory_space<vmem>>, %arg5: memref<128x256xf32, #tpu.memory_space<vmem>>, %arg6: memref<128x128xf32, #tpu.memory_space<vmem>>, %arg7: memref<128x128xf32, #tpu.memory_space<vmem>>, %arg8: memref<7x128xf32, #tpu.memory_space<vmem>>, %arg9: memref<1x64x128xf32, #tpu.memory_space<vmem>>, %arg10: memref<16x256xf32, #tpu.memory_space<vmem>>, %arg11: memref<64x128xf32, #tpu.memory_space<vmem>>) attributes {dimension_semantics = [#tpu.dimension_semantics<parallel>, #tpu.dimension_semantics<arbitrary>], iteration_bounds = array<i64: 2, 1>, scalar_prefetch = 0 : i64, scratch_operands = 2 : i64, tpu.core_type = #tpu.core_type<tc>, window_params = [{transform_indices = @transform_0, window_bounds = array<i64: 1, 64, 128>}, {transform_indices = @transform_1, window_bounds = array<i64: 1, 16, 128>}, {pipeline_mode = #tpu.pipeline_mode<synchronous>, transform_indices = @transform_2, window_bounds = array<i64: 128, 128>}, {pipeline_mode = #tpu.pipeline_mode<synchronous>, transform_indices = @transform_3, window_bounds = array<i64: 128, 256>}, {pipeline_mode = #tpu.pipeline_mode<synchronous>, transform_indices = @transform_4, window_bounds = array<i64: 128, 128>}, {pipeline_mode = #tpu.pipeline_mode<synchronous>, transform_indices = @transform_5, window_bounds = array<i64: 128, 128>}, {pipeline_mode = #tpu.pipeline_mode<synchronous>, transform_indices = @transform_6, window_bounds = array<i64: 7, 128>}, {transform_indices = @transform_7, window_bounds = array<i64: 1, 64, 128>}]} {
    %c0 = arith.constant 0 : index
    %c0_0 = arith.constant 0 : index
    %c0_1 = arith.constant 0 : index
    %0 = vector.load %arg2[%c0, %c0_0, %c0_1] : memref<1x64x128xf32, #tpu.memory_space<vmem>>, vector<1x64x128xf32>
    %1 = vector.shape_cast %0 : vector<1x64x128xf32> to vector<64x128xf32>
    %c0_2 = arith.constant 0 : index
    %c0_3 = arith.constant 0 : index
    %2 = vector.load %arg8[%c0_2, %c0_3] : memref<7x128xf32, #tpu.memory_space<vmem>>, vector<7x128xf32>
    %3 = vector.extract_strided_slice %2 {offsets = [0, 0], sizes = [1, 128], strides = [1, 1]} : vector<7x128xf32> to vector<1x128xf32>
    %4 = vector.extract_strided_slice %2 {offsets = [1, 0], sizes = [1, 128], strides = [1, 1]} : vector<7x128xf32> to vector<1x128xf32>
    %5 = vector.extract_strided_slice %2 {offsets = [2, 0], sizes = [1, 128], strides = [1, 1]} : vector<7x128xf32> to vector<1x128xf32>
    %6 = vector.extract_strided_slice %2 {offsets = [3, 0], sizes = [1, 128], strides = [1, 1]} : vector<7x128xf32> to vector<1x128xf32>
    %7 = vector.extract_strided_slice %2 {offsets = [4, 0], sizes = [1, 128], strides = [1, 1]} : vector<7x128xf32> to vector<1x128xf32>
    %8 = vector.extract_strided_slice %2 {offsets = [5, 0], sizes = [1, 128], strides = [1, 1]} : vector<7x128xf32> to vector<1x128xf32>
    %9 = vector.extract_strided_slice %2 {offsets = [6, 0], sizes = [1, 128], strides = [1, 1]} : vector<7x128xf32> to vector<1x128xf32>
    %c0_i32 = arith.constant 0 : i32
    %10 = arith.cmpi eq, %arg1, %c0_i32 : i32
    %11 = arith.extui %10 : i1 to i32
    %c0_i32_4 = arith.constant 0 : i32
    %12 = arith.cmpi ne, %11, %c0_i32_4 : i32
    scf.if %12 {
      %c0_58 = arith.constant 0 : index
      %c0_59 = arith.constant 0 : index
      %c0_60 = arith.constant 0 : index
      %118 = vector.load %arg3[%c0_58, %c0_59, %c0_60] : memref<1x16x128xf32, #tpu.memory_space<vmem>>, vector<1x16x128xf32>
      %119 = vector.shape_cast %118 : vector<1x16x128xf32> to vector<16x128xf32>
      %c0_61 = arith.constant 0 : index
      %c0_62 = arith.constant 0 : index
      %120 = vector.load %arg5[%c0_61, %c0_62] : memref<128x256xf32, #tpu.memory_space<vmem>>, vector<128x256xf32>
      %cst_63 = arith.constant dense<0.000000e+00> : vector<16x256xf32>
      %121 = tpu.matmul %119, %120, %cst_63 {dimension_numbers = #tpu.dot_dimension_numbers<[1], [0], [0], [1], [0, 0, 1, 1], [], []>} : vector<16x128xf32>, vector<128x256xf32>, vector<16x256xf32> -> vector<16x256xf32>
      %122 = vector.extract_strided_slice %121 {offsets = [0, 0], sizes = [16, 128], strides = [1, 1]} : vector<16x256xf32> to vector<16x128xf32>
      %123 = vector.broadcast %4 : vector<1x128xf32> to vector<16x128xf32>
      %124 = arith.addf %122, %123 : vector<16x128xf32>
      %c0_64 = arith.constant 0 : index
      %c0_65 = arith.constant 0 : index
      %125 = vector.load %arg10[%c0_64, %c0_65] : memref<16x256xf32, #tpu.memory_space<vmem>>, vector<16x128xf32>
      tpu.vector_store %arg10[%c0_64, %c0_65], %124 {strides = array<i32>} : memref<16x256xf32, #tpu.memory_space<vmem>>, vector<16x128xf32>,
      %126 = vector.extract_strided_slice %121 {offsets = [0, 128], sizes = [16, 128], strides = [1, 1]} : vector<16x256xf32> to vector<16x128xf32>
      %127 = vector.broadcast %5 : vector<1x128xf32> to vector<16x128xf32>
      %128 = arith.addf %126, %127 : vector<16x128xf32>
      %c0_66 = arith.constant 0 : index
      %c128_67 = arith.constant 128 : index
      %129 = vector.load %arg10[%c0_66, %c128_67] : memref<16x256xf32, #tpu.memory_space<vmem>>, vector<16x128xf32>
      tpu.vector_store %arg10[%c0_66, %c128_67], %128 {strides = array<i32>} : memref<16x256xf32, #tpu.memory_space<vmem>>, vector<16x128xf32>,
    } else {
    }
    %c0_5 = arith.constant 0 : index
    %c0_6 = arith.constant 0 : index
    %13 = vector.load %arg4[%c0_5, %c0_6] : memref<128x128xf32, #tpu.memory_space<vmem>>, vector<128x128xf32>
    %cst = arith.constant dense<0.000000e+00> : vector<64x128xf32>
    %14 = tpu.matmul %1, %13, %cst {dimension_numbers = #tpu.dot_dimension_numbers<[1], [0], [0], [1], [0, 0, 1, 1], [], []>} : vector<64x128xf32>, vector<128x128xf32>, vector<64x128xf32> -> vector<64x128xf32>
    %15 = vector.broadcast %3 : vector<1x128xf32> to vector<64x128xf32>
    %16 = arith.addf %14, %15 : vector<64x128xf32>
    %cst_7 = arith.constant 0.176776692 : f32
    %17 = vector.broadcast %cst_7 : f32 to vector<64x128xf32>
    %18 = arith.mulf %16, %17 : vector<64x128xf32>
    %19 = vector.extract_strided_slice %18 {offsets = [0, 0], sizes = [64, 32], strides = [1, 1]} : vector<64x128xf32> to vector<64x32xf32>
    %c0_8 = arith.constant 0 : index
    %c0_9 = arith.constant 0 : index
    %20 = vector.load %arg10[%c0_8, %c0_9] : memref<16x256xf32, #tpu.memory_space<vmem>>, vector<16x32xf32>
    %c0_10 = arith.constant 0 : index
    %c128 = arith.constant 128 : index
    %21 = vector.load %arg10[%c0_10, %c128] : memref<16x256xf32, #tpu.memory_space<vmem>>, vector<16x32xf32>
    "tpu.trace_start"() <{level = 10 : i32, message = "qd,kd->qk"}> : () -> ()
    %cst_11 = arith.constant dense<0.000000e+00> : vector<64x16xf32>
    %22 = tpu.matmul %19, %20, %cst_11 {dimension_numbers = #tpu.dot_dimension_numbers<[1], [1], [0], [0], [0, 0, 1, 0], [], []>} : vector<64x32xf32>, vector<16x32xf32>, vector<64x16xf32> -> vector<64x16xf32>
    "tpu.trace_stop"() : () -> ()
    %cst_12 = arith.constant dense<0xFF800000> : vector<64xf32>
    %23 = vector.multi_reduction <maximumf>, %22, %cst_12 [1] : vector<64x16xf32> to vector<64xf32>
    %24 = vector.shape_cast %23 : vector<64xf32> to vector<64x1xf32>
    %25 = vector.broadcast %24 : vector<64x1xf32> to vector<64x16xf32>
    %26 = arith.subf %22, %25 : vector<64x16xf32>
    %27 = math.exp %26 : vector<64x16xf32>
    %cst_13 = arith.constant dense<0.000000e+00> : vector<64xf32>
    %28 = vector.multi_reduction <add>, %27, %cst_13 [1] : vector<64x16xf32> to vector<64xf32>
    %29 = vector.shape_cast %28 : vector<64xf32> to vector<64x1xf32>
    %cst_14 = arith.constant dense<0.000000e+00> : vector<64x32xf32>
    %30 = tpu.matmul %27, %21, %cst_14 {dimension_numbers = #tpu.dot_dimension_numbers<[1], [0], [0], [1], [0, 0, 1, 1], [], []>} : vector<64x16xf32>, vector<16x32xf32>, vector<64x32xf32> -> vector<64x32xf32>
    %31 = tpu.reciprocal %29 {approx = true} : vector<64x1xf32> -> vector<64x1xf32>
    %32 = vector.broadcast %31 : vector<64x1xf32> to vector<64x32xf32>
    %33 = arith.mulf %30, %32 : vector<64x32xf32>
    %c0_15 = arith.constant 0 : index
    %c0_16 = arith.constant 0 : index
    %34 = vector.load %arg11[%c0_15, %c0_16] : memref<64x128xf32, #tpu.memory_space<vmem>>, vector<64x32xf32>
    tpu.vector_store %arg11[%c0_15, %c0_16], %33 {strides = array<i32>} : memref<64x128xf32, #tpu.memory_space<vmem>>, vector<64x32xf32>,
    %35 = vector.extract_strided_slice %18 {offsets = [0, 32], sizes = [64, 32], strides = [1, 1]} : vector<64x128xf32> to vector<64x32xf32>
    %c0_17 = arith.constant 0 : index
    %c32 = arith.constant 32 : index
    %36 = vector.load %arg10[%c0_17, %c32] : memref<16x256xf32, #tpu.memory_space<vmem>>, vector<16x32xf32>
    %c0_18 = arith.constant 0 : index
    %c160 = arith.constant 160 : index
    %37 = vector.load %arg10[%c0_18, %c160] : memref<16x256xf32, #tpu.memory_space<vmem>>, vector<16x32xf32>
    "tpu.trace_start"() <{level = 10 : i32, message = "qd,kd->qk"}> : () -> ()
    %cst_19 = arith.constant dense<0.000000e+00> : vector<64x16xf32>
    %38 = tpu.matmul %35, %36, %cst_19 {dimension_numbers = #tpu.dot_dimension_numbers<[1], [1], [0], [0], [0, 0, 1, 0], [], []>} : vector<64x32xf32>, vector<16x32xf32>, vector<64x16xf32> -> vector<64x16xf32>
    "tpu.trace_stop"() : () -> ()
    %cst_20 = arith.constant dense<0xFF800000> : vector<64xf32>
    %39 = vector.multi_reduction <maximumf>, %38, %cst_20 [1] : vector<64x16xf32> to vector<64xf32>
    %40 = vector.shape_cast %39 : vector<64xf32> to vector<64x1xf32>
    %41 = vector.broadcast %40 : vector<64x1xf32> to vector<64x16xf32>
    %42 = arith.subf %38, %41 : vector<64x16xf32>
    %43 = math.exp %42 : vector<64x16xf32>
    %cst_21 = arith.constant dense<0.000000e+00> : vector<64xf32>
    %44 = vector.multi_reduction <add>, %43, %cst_21 [1] : vector<64x16xf32> to vector<64xf32>
    %45 = vector.shape_cast %44 : vector<64xf32> to vector<64x1xf32>
    %cst_22 = arith.constant dense<0.000000e+00> : vector<64x32xf32>
    %46 = tpu.matmul %43, %37, %cst_22 {dimension_numbers = #tpu.dot_dimension_numbers<[1], [0], [0], [1], [0, 0, 1, 1], [], []>} : vector<64x16xf32>, vector<16x32xf32>, vector<64x32xf32> -> vector<64x32xf32>
    %47 = tpu.reciprocal %45 {approx = true} : vector<64x1xf32> -> vector<64x1xf32>
    %48 = vector.broadcast %47 : vector<64x1xf32> to vector<64x32xf32>
    %49 = arith.mulf %46, %48 : vector<64x32xf32>
    %c0_23 = arith.constant 0 : index
    %c32_24 = arith.constant 32 : index
    %50 = vector.load %arg11[%c0_23, %c32_24] : memref<64x128xf32, #tpu.memory_space<vmem>>, vector<64x32xf32>
    tpu.vector_store %arg11[%c0_23, %c32_24], %49 {strides = array<i32>} : memref<64x128xf32, #tpu.memory_space<vmem>>, vector<64x32xf32>,
    %51 = vector.extract_strided_slice %18 {offsets = [0, 64], sizes = [64, 32], strides = [1, 1]} : vector<64x128xf32> to vector<64x32xf32>
    %c0_25 = arith.constant 0 : index
    %c64 = arith.constant 64 : index
    %52 = vector.load %arg10[%c0_25, %c64] : memref<16x256xf32, #tpu.memory_space<vmem>>, vector<16x32xf32>
    %c0_26 = arith.constant 0 : index
    %c192 = arith.constant 192 : index
    %53 = vector.load %arg10[%c0_26, %c192] : memref<16x256xf32, #tpu.memory_space<vmem>>, vector<16x32xf32>
    "tpu.trace_start"() <{level = 10 : i32, message = "qd,kd->qk"}> : () -> ()
    %cst_27 = arith.constant dense<0.000000e+00> : vector<64x16xf32>
    %54 = tpu.matmul %51, %52, %cst_27 {dimension_numbers = #tpu.dot_dimension_numbers<[1], [1], [0], [0], [0, 0, 1, 0], [], []>} : vector<64x32xf32>, vector<16x32xf32>, vector<64x16xf32> -> vector<64x16xf32>
    "tpu.trace_stop"() : () -> ()
    %cst_28 = arith.constant dense<0xFF800000> : vector<64xf32>
    %55 = vector.multi_reduction <maximumf>, %54, %cst_28 [1] : vector<64x16xf32> to vector<64xf32>
    %56 = vector.shape_cast %55 : vector<64xf32> to vector<64x1xf32>
    %57 = vector.broadcast %56 : vector<64x1xf32> to vector<64x16xf32>
    %58 = arith.subf %54, %57 : vector<64x16xf32>
    %59 = math.exp %58 : vector<64x16xf32>
    %cst_29 = arith.constant dense<0.000000e+00> : vector<64xf32>
    %60 = vector.multi_reduction <add>, %59, %cst_29 [1] : vector<64x16xf32> to vector<64xf32>
    %61 = vector.shape_cast %60 : vector<64xf32> to vector<64x1xf32>
    %cst_30 = arith.constant dense<0.000000e+00> : vector<64x32xf32>
    %62 = tpu.matmul %59, %53, %cst_30 {dimension_numbers = #tpu.dot_dimension_numbers<[1], [0], [0], [1], [0, 0, 1, 1], [], []>} : vector<64x16xf32>, vector<16x32xf32>, vector<64x32xf32> -> vector<64x32xf32>
    %63 = tpu.reciprocal %61 {approx = true} : vector<64x1xf32> -> vector<64x1xf32>
    %64 = vector.broadcast %63 : vector<64x1xf32> to vector<64x32xf32>
    %65 = arith.mulf %62, %64 : vector<64x32xf32>
    %c0_31 = arith.constant 0 : index
    %c64_32 = arith.constant 64 : index
    %66 = vector.load %arg11[%c0_31, %c64_32] : memref<64x128xf32, #tpu.memory_space<vmem>>, vector<64x32xf32>
    tpu.vector_store %arg11[%c0_31, %c64_32], %65 {strides = array<i32>} : memref<64x128xf32, #tpu.memory_space<vmem>>, vector<64x32xf32>,
    %67 = vector.extract_strided_slice %18 {offsets = [0, 96], sizes = [64, 32], strides = [1, 1]} : vector<64x128xf32> to vector<64x32xf32>
    %c0_33 = arith.constant 0 : index
    %c96 = arith.constant 96 : index
    %68 = vector.load %arg10[%c0_33, %c96] : memref<16x256xf32, #tpu.memory_space<vmem>>, vector<16x32xf32>
    %c0_34 = arith.constant 0 : index
    %c224 = arith.constant 224 : index
    %69 = vector.load %arg10[%c0_34, %c224] : memref<16x256xf32, #tpu.memory_space<vmem>>, vector<16x32xf32>
    "tpu.trace_start"() <{level = 10 : i32, message = "qd,kd->qk"}> : () -> ()
    %cst_35 = arith.constant dense<0.000000e+00> : vector<64x16xf32>
    %70 = tpu.matmul %67, %68, %cst_35 {dimension_numbers = #tpu.dot_dimension_numbers<[1], [1], [0], [0], [0, 0, 1, 0], [], []>} : vector<64x32xf32>, vector<16x32xf32>, vector<64x16xf32> -> vector<64x16xf32>
    "tpu.trace_stop"() : () -> ()
    %cst_36 = arith.constant dense<0xFF800000> : vector<64xf32>
    %71 = vector.multi_reduction <maximumf>, %70, %cst_36 [1] : vector<64x16xf32> to vector<64xf32>
    %72 = vector.shape_cast %71 : vector<64xf32> to vector<64x1xf32>
    %73 = vector.broadcast %72 : vector<64x1xf32> to vector<64x16xf32>
    %74 = arith.subf %70, %73 : vector<64x16xf32>
    %75 = math.exp %74 : vector<64x16xf32>
    %cst_37 = arith.constant dense<0.000000e+00> : vector<64xf32>
    %76 = vector.multi_reduction <add>, %75, %cst_37 [1] : vector<64x16xf32> to vector<64xf32>
    %77 = vector.shape_cast %76 : vector<64xf32> to vector<64x1xf32>
    %cst_38 = arith.constant dense<0.000000e+00> : vector<64x32xf32>
    %78 = tpu.matmul %75, %69, %cst_38 {dimension_numbers = #tpu.dot_dimension_numbers<[1], [0], [0], [1], [0, 0, 1, 1], [], []>} : vector<64x16xf32>, vector<16x32xf32>, vector<64x32xf32> -> vector<64x32xf32>
    %79 = tpu.reciprocal %77 {approx = true} : vector<64x1xf32> -> vector<64x1xf32>
    %80 = vector.broadcast %79 : vector<64x1xf32> to vector<64x32xf32>
    %81 = arith.mulf %78, %80 : vector<64x32xf32>
    %c0_39 = arith.constant 0 : index
    %c96_40 = arith.constant 96 : index
    %82 = vector.load %arg11[%c0_39, %c96_40] : memref<64x128xf32, #tpu.memory_space<vmem>>, vector<64x32xf32>
    tpu.vector_store %arg11[%c0_39, %c96_40], %81 {strides = array<i32>} : memref<64x128xf32, #tpu.memory_space<vmem>>, vector<64x32xf32>,
    %c0_41 = arith.constant 0 : index
    %c0_42 = arith.constant 0 : index
    %83 = vector.load %arg11[%c0_41, %c0_42] : memref<64x128xf32, #tpu.memory_space<vmem>>, vector<64x128xf32>
    %c0_43 = arith.constant 0 : index
    %c0_44 = arith.constant 0 : index
    %84 = vector.load %arg6[%c0_43, %c0_44] : memref<128x128xf32, #tpu.memory_space<vmem>>, vector<128x128xf32>
    %cst_45 = arith.constant dense<0.000000e+00> : vector<64x128xf32>
    %85 = tpu.matmul %83, %84, %cst_45 {dimension_numbers = #tpu.dot_dimension_numbers<[1], [0], [0], [1], [0, 0, 1, 1], [], []>} : vector<64x128xf32>, vector<128x128xf32>, vector<64x128xf32> -> vector<64x128xf32>
    %86 = vector.broadcast %6 : vector<1x128xf32> to vector<64x128xf32>
    %87 = arith.addf %85, %86 : vector<64x128xf32>
    %88 = arith.addf %87, %1 : vector<64x128xf32>
    %cst_46 = arith.constant dense<0.000000e+00> : vector<64xf32>
    %89 = vector.multi_reduction <add>, %88, %cst_46 [1] : vector<64x128xf32> to vector<64xf32>
    %90 = vector.shape_cast %89 : vector<64xf32> to vector<64x1xf32>
    %cst_47 = arith.constant 1.280000e+02 : f32
    %91 = vector.broadcast %cst_47 : f32 to vector<64x1xf32>
    %92 = arith.divf %90, %91 : vector<64x1xf32>
    %93 = vector.broadcast %92 : vector<64x1xf32> to vector<64x128xf32>
    %94 = arith.subf %88, %93 : vector<64x128xf32>
    %95 = arith.mulf %94, %94 : vector<64x128xf32>
    %cst_48 = arith.constant dense<0.000000e+00> : vector<64xf32>
    %96 = vector.multi_reduction <add>, %95, %cst_48 [1] : vector<64x128xf32> to vector<64xf32>
    %97 = vector.shape_cast %96 : vector<64xf32> to vector<64x1xf32>
    %cst_49 = arith.constant 1.280000e+02 : f32
    %98 = vector.broadcast %cst_49 : f32 to vector<64x1xf32>
    %99 = arith.divf %97, %98 : vector<64x1xf32>
    %cst_50 = arith.constant 9.99999974E-6 : f32
    %100 = vector.broadcast %cst_50 : f32 to vector<64x1xf32>
    %101 = arith.addf %99, %100 : vector<64x1xf32>
    %102 = math.rsqrt %101 : vector<64x1xf32>
    %103 = vector.broadcast %102 : vector<64x1xf32> to vector<64x128xf32>
    %104 = arith.mulf %94, %103 : vector<64x128xf32>
    %105 = vector.broadcast %7 : vector<1x128xf32> to vector<64x128xf32>
    %106 = arith.mulf %104, %105 : vector<64x128xf32>
    %107 = vector.broadcast %8 : vector<1x128xf32> to vector<64x128xf32>
    %108 = arith.addf %106, %107 : vector<64x128xf32>
    %c0_51 = arith.constant 0 : index
    %c0_52 = arith.constant 0 : index
    %109 = vector.load %arg7[%c0_51, %c0_52] : memref<128x128xf32, #tpu.memory_space<vmem>>, vector<128x128xf32>
    %cst_53 = arith.constant dense<0.000000e+00> : vector<64x128xf32>
    %110 = tpu.matmul %108, %109, %cst_53 {dimension_numbers = #tpu.dot_dimension_numbers<[1], [0], [0], [1], [0, 0, 1, 1], [], []>} : vector<64x128xf32>, vector<128x128xf32>, vector<64x128xf32> -> vector<64x128xf32>
    %111 = vector.broadcast %9 : vector<1x128xf32> to vector<64x128xf32>
    %112 = arith.addf %110, %111 : vector<64x128xf32>
    %cst_54 = arith.constant 0.000000e+00 : f32
    %113 = vector.broadcast %cst_54 : f32 to vector<64x128xf32>
    %114 = arith.maximumf %112, %113 : vector<64x128xf32>
    %c0_55 = arith.constant 0 : index
    %c0_56 = arith.constant 0 : index
    %c0_57 = arith.constant 0 : index
    %115 = vector.load %arg9[%c0_55, %c0_56, %c0_57] : memref<1x64x128xf32, #tpu.memory_space<vmem>>, vector<1x64x128xf32>
    %116 = vector.shape_cast %115 : vector<1x64x128xf32> to vector<64x128xf32>
    %117 = vector.shape_cast %114 : vector<64x128xf32> to vector<1x64x128xf32>
    tpu.vector_store %arg9[%c0_55, %c0_56, %c0_57], %117 {strides = array<i32>} : memref<1x64x128xf32, #tpu.memory_space<vmem>>, vector<1x64x128xf32>,
    return
  }
  func.func @transform_0(%arg0: i32, %arg1: i32) -> (i32, i32, i32) {
    %c0_i32 = arith.constant 0 : i32
    %c0_i32_0 = arith.constant 0 : i32
    return %arg0, %arg1, %c0_i32 : i32, i32, i32
  }
  func.func @transform_1(%arg0: i32, %arg1: i32) -> (i32, i32, i32) {
    %c0_i32 = arith.constant 0 : i32
    %c0_i32_0 = arith.constant 0 : i32
    %c0_i32_1 = arith.constant 0 : i32
    return %arg0, %c0_i32, %c0_i32_0 : i32, i32, i32
  }
  func.func @transform_2(%arg0: i32, %arg1: i32) -> (i32, i32) {
    %c0_i32 = arith.constant 0 : i32
    %c0_i32_0 = arith.constant 0 : i32
    %c0_i32_1 = arith.constant 0 : i32
    return %c0_i32, %c0_i32_0 : i32, i32
  }
  func.func @transform_3(%arg0: i32, %arg1: i32) -> (i32, i32) {
    %c0_i32 = arith.constant 0 : i32
    %c0_i32_0 = arith.constant 0 : i32
    %c0_i32_1 = arith.constant 0 : i32
    return %c0_i32, %c0_i32_0 : i32, i32
  }
  func.func @transform_4(%arg0: i32, %arg1: i32) -> (i32, i32) {
    %c0_i32 = arith.constant 0 : i32
    %c0_i32_0 = arith.constant 0 : i32
    %c0_i32_1 = arith.constant 0 : i32
    return %c0_i32, %c0_i32_0 : i32, i32
  }
  func.func @transform_5(%arg0: i32, %arg1: i32) -> (i32, i32) {
    %c0_i32 = arith.constant 0 : i32
    %c0_i32_0 = arith.constant 0 : i32
    %c0_i32_1 = arith.constant 0 : i32
    return %c0_i32, %c0_i32_0 : i32, i32
  }
  func.func @transform_6(%arg0: i32, %arg1: i32) -> (i32, i32) {
    %c0_i32 = arith.constant 0 : i32
    %c0_i32_0 = arith.constant 0 : i32
    %c0_i32_1 = arith.constant 0 : i32
    return %c0_i32, %c0_i32_0 : i32, i32
  }
  func.func @transform_7(%arg0: i32, %arg1: i32) -> (i32, i32, i32) {
    %c0_i32 = arith.constant 0 : i32
    %c0_i32_0 = arith.constant 0 : i32
    return %arg0, %arg1, %c0_i32 : i32, i32, i32
  }
}

</mosaic_0001>

<llo_original>
// kernel: tpu_custom_call.1
$region0: #{tpu_custom_call.1}
  #allocation0 [shape = 'u32[]', space=smem, size = 0x4, offset = 0x4, fixed_abs, tag = 'smem constant byte address 0x4 - core index']
  #allocation1 [shape = 'u32[144,128]{1,0:T(1,128)}', space=vmem, size = 0x12000, scoped, tag = 'internal scratch']
  %s0 = inlined_call_operand.hbm [shape: f32[8,128], index: 0, kind: input, shape index: {}]
  %s1 = inlined_call_operand.hbm [shape: f32[8,128], index: 1, kind: output, shape index: {}]
  %s2 = sld [smem:[#allocation0]]
  $region41: #{tpu_custom_call.1} parent=0
    _
  %s4 = ssub.s32 1, %s2
  %s5 = scalar_select 0, %s4, %s2
  $region1: #{tpu_custom_call.1} parent=0
    #allocation2 [shape = 'u8[4096]{0}', space=vmem, size = 0x1000, scoped, tag = 'input window, operand 0, single buffered']
    #allocation3 [shape = 's32[2]{0}', space=sflag, size = 0x8, scoped, tag = 'scoped memory for tpu_custom_call.1']
    #allocation4 [shape = 's32[2]{0}', space=sflag, size = 0x8, scoped, tag = 'scoped memory for tpu_custom_call.1']
    #allocation5 [shape = 'u8[4096]{0}', space=vmem, size = 0x1000, scoped, tag = 'output window, operand 0, single buffered']
    %6 = vsyncpa [#allocation3], 0
    %7 = vsyncpa [#allocation4], 0
    loop: start=0, step=1, limit=4
    $region2: #{tpu_custom_call.1} parent=1 // loop_pre_header
      _
    $region3: #{tpu_custom_call.1} parent=1 // loop_header
      %s9 = sphi 0, %s13
      %p10 = scmp.ge.s32.totalorder %s9, 4
      %s17 = sphi 0, %s17
      %s19 = sphi 0, %s17
      %s20 = sphi 0, %s19
      %s34 = sphi 0, %s20
      %s38 = sphi 0, %s38
      %s40 = sphi 0, %s38
      %s41 = sphi 0, %s40
      %s55 = sphi 0, %s41
    $region4: #{tpu_custom_call.1} parent=1 // loop_header_branch
      %12 = sbr.rel (%p10) target = $region8
    $region5: #{tpu_custom_call.1} parent=1 // loop_body
      %s14 = ssub.s32 %s9, 1
      %s15 = ssub.s32 %s9, 2
      %s16 = sadd.s32 %s9, 1
      %s18 = sadd.s32 %s17, 1
      %p21 = scmp.eq.s32.totalorder %s9, 1
      %p22 = scmp.ne.s32.totalorder %s17, %s19
      %p23 = scmp.eq.s32.totalorder %s9, 0
      %p24 = por %p22, %p23
      %p25 = scmp.ne.s32.totalorder %s17, %s19
      %p26 = scmp.eq.s32.totalorder %s14, 1
      %p27 = por %p25, %p26
      %p28 = scmp.ne.s32.totalorder %s19, %s20
      %p29 = scmp.eq.s32.totalorder %s14, 0
      %p30 = por %p28, %p29
      %p31 = scmp.ne.s32.totalorder %s19, %s20
      %p32 = scmp.eq.s32.totalorder %s15, 1
      %p33 = por %p31, %p32
      %p35 = scmp.ne.s32.totalorder %s20, %s34
      %p36 = scmp.eq.s32.totalorder %s15, 0
      %p37 = por %p35, %p36
      %s39 = sadd.s32 %s38, 1
      %p42 = scmp.eq.s32.totalorder %s9, 1
      %p43 = scmp.ne.s32.totalorder %s38, %s40
      %p44 = scmp.eq.s32.totalorder %s9, 0
      %p45 = por %p43, %p44
      %p46 = scmp.ne.s32.totalorder %s38, %s40
      %p47 = scmp.eq.s32.totalorder %s14, 1
      %p48 = por %p46, %p47
      %p49 = scmp.ne.s32.totalorder %s40, %s41
      %p50 = scmp.eq.s32.totalorder %s14, 0
      %p51 = por %p49, %p50
      %p52 = scmp.ne.s32.totalorder %s40, %s41
      %p53 = scmp.eq.s32.totalorder %s15, 1
      %p54 = por %p52, %p53
      %p56 = scmp.ne.s32.totalorder %s41, %s55
      %p57 = scmp.eq.s32.totalorder %s15, 0
      %p58 = por %p56, %p57
      %p59 = scmp.le.s32.totalorder 1, %s9
      %p60 = scmp.lt.s32.totalorder %s9, 3
      %p61 = pnand %p59, %p60
      %p62 = pneg %p61
      // Predicated region
      $region9: #{tpu_custom_call.1} parent=5 // pred_check
        _
      $region10: #{tpu_custom_call.1} parent=5 // pred_check_branch
        %64 = sbr.rel (%p61) target = $region12
      $region11: #{tpu_custom_call.1} parent=5 // pred_region
        %s65 = ssub.s32 %s9, 1
        // Predicated region
        $region13: #{tpu_custom_call.1} parent=11 // pred_check
          %p66 = pneg %p30
        $region14: #{tpu_custom_call.1} parent=11 // pred_check_branch
          %68 = sbr.rel (%p66) target = $region16
        $region15: #{tpu_custom_call.1} parent=11 // pred_region
          %s70 = ssub.s32 128, 128
          %71 = vsyncadd [#allocation3], %s70
          %s73 = sshll.u32 [#allocation2], 4
          %s74 = int_to_ptr.vmem [resolvable:$true] %s73
          %76 = dma.hbm_to_vmem [thread:$0]  %s0, 128, %s74, [#allocation3]
        $region16: #{tpu_custom_call.1} parent=11 // pred_fallthru
          _
      $region12: #{tpu_custom_call.1} parent=5 // pred_fallthru
        _
      %p77 = scmp.lt.s32.totalorder %s9, 2
      // Predicated region
      $region17: #{tpu_custom_call.1} parent=5 // pred_check
        %p78 = pneg %p77
      $region18: #{tpu_custom_call.1} parent=5 // pred_check_branch
        %80 = sbr.rel (%p78) target = $region20
      $region19: #{tpu_custom_call.1} parent=5 // pred_region
        _
      $region20: #{tpu_custom_call.1} parent=5 // pred_fallthru
        _
      %p81 = scmp.le.s32.totalorder 1, %s9
      %p82 = scmp.lt.s32.totalorder %s9, 3
      %p83 = pnand %p81, %p82
      %p84 = pneg %p83
      // Predicated region
      $region21: #{tpu_custom_call.1} parent=5 // pred_check
        _
      $region22: #{tpu_custom_call.1} parent=5 // pred_check_branch
        %86 = sbr.rel (%p83) target = $region24
      $region23: #{tpu_custom_call.1} parent=5 // pred_region
        %s87 = ssub.s32 %s9, 1
        // Predicated region
        $region25: #{tpu_custom_call.1} parent=23 // pred_check
          %p88 = pneg %p30
        $region26: #{tpu_custom_call.1} parent=23 // pred_check_branch
          %90 = sbr.rel (%p88) target = $region28
        $region27: #{tpu_custom_call.1} parent=23 // pred_region
          %91 = dma.done [#allocation3], 128
        $region28: #{tpu_custom_call.1} parent=23 // pred_fallthru
          _
        %p92 = pneg %p30
        %p93 = pneg %p27
        %p94 = pneg %p51
        %p95 = pneg %p48
        %v96 = vld [vmem:[#allocation2] sm:$0xff]
        %v97 = vadd.f32 %v96, 1.0
        %98 = vst [vmem:[#allocation5] sm:$0xff] %v97
        // Predicated region
        $region29: #{tpu_custom_call.1} parent=23 // pred_check
          %p99 = pneg %p48
        $region30: #{tpu_custom_call.1} parent=23 // pred_check_branch
          %101 = sbr.rel (%p99) target = $region32
        $region31: #{tpu_custom_call.1} parent=23 // pred_region
          %s103 = ssub.s32 128, 128
          %104 = vsyncadd [#allocation4], %s103
          %s106 = sshll.u32 [#allocation5], 4
          %s107 = int_to_ptr.vmem [resolvable:$true] %s106
          %109 = dma.vmem_to_hbm [thread:$0]  %s107, 128, %s1, [#allocation4]
        $region32: #{tpu_custom_call.1} parent=23 // pred_fallthru
          _
        // Predicated region
        $region33: #{tpu_custom_call.1} parent=23 // pred_check
          %p110 = pneg %p48
        $region34: #{tpu_custom_call.1} parent=23 // pred_check_branch
          %112 = sbr.rel (%p110) target = $region36
        $region35: #{tpu_custom_call.1} parent=23 // pred_region
          %113 = dma.done [#allocation4], 128
        $region36: #{tpu_custom_call.1} parent=23 // pred_fallthru
          _
      $region24: #{tpu_custom_call.1} parent=5 // pred_fallthru
        _
      %p114 = scmp.le.s32.totalorder 2, %s9
      // Predicated region
      $region37: #{tpu_custom_call.1} parent=5 // pred_check
        %p115 = pneg %p114
      $region38: #{tpu_custom_call.1} parent=5 // pred_check_branch
        %117 = sbr.rel (%p115) target = $region40
      $region39: #{tpu_custom_call.1} parent=5 // pred_region
        %s118 = ssub.s32 %s9, 2
      $region40: #{tpu_custom_call.1} parent=5 // pred_fallthru
        _
    $region6: #{tpu_custom_call.1} parent=1 // loop_footer
      %s13 = sadd.s32 1, %s9
    $region7: #{tpu_custom_call.1} parent=1 // loop_footer_branch
      %8 = sbr.rel target = $region3
    $region8: #{tpu_custom_call.1} parent=1 // loop_exit
      _
    %119 = vsyncpa [#allocation3], 1
    %s120 = scalar_lea.sflag [#allocation3], 1
    %121 = vsyncpa %s120, 1
    %122 = vsyncpa [#allocation4], 1
    %s123 = scalar_lea.sflag [#allocation4], 1
    %124 = vsyncpa %s123, 1

</llo_original>
